<compile_context>
chip_gen: v7x
topology: tpu7x:2x2x1
jax: 0.10.0
libtpu: 0.0.40
codegen_flags: <defaults>
</compile_context>

<pallas_src>
import functools
import math

import jax
import jax.numpy as jnp
from jax.experimental import pallas as pl
from jax.experimental.pallas import tpu as pltpu

PAD_ID = 0            # TODO(synk): PAD_ID is undefined in the source module; assume 0.
LN_EPS = 1e-5         # PyTorch LayerNorm default eps
NEG_INF = -1e30       # additive mask value for padded keys
VMEM_LIMIT_BYTES = 48 * 1024 * 1024   # > default scoped limit, < v7x 64 MiB physical


def _layernorm(x, gamma, beta):
    mean = jnp.mean(x, axis=-1, keepdims=True)
    var = jnp.mean((x - mean) ** 2, axis=-1, keepdims=True)
    return (x - mean) * jax.lax.rsqrt(var + LN_EPS) * gamma + beta


# ---------------------------------------------------------------------------
# Block-size pickers (keep blocks divisors of the array dims; full dim if small)
# ---------------------------------------------------------------------------
def _pick_rows_block(rows, target=512):
    if rows <= target:
        return rows
    for tm in range(target - target % 8, 0, -8):
        if rows % tm == 0:
            return tm
    return rows


def _pick_batch_block(B, S, target_rows=512):
    best = 1
    for bb in range(1, B + 1):
        if B % bb == 0 and bb * S <= max(target_rows, S):
            best = bb
    return best


def _pick_ff_block(FF, target=512):
    if FF <= target:
        return FF
    for t in range(target - target % 128, 0, -128):
        if FF % t == 0:
            return t
    return FF


# ---------------------------------------------------------------------------
# Kernel 1: joint embedding sum + LayerNorm over flat (B*S, D) row blocks.
# ---------------------------------------------------------------------------
def embed_kernel(tok_ref, pos_ref, seg_ref, gamma_ref, beta_ref, out_ref):
    x = tok_ref[...] + pos_ref[...] + seg_ref[...]          # (tm, D) f32
    out_ref[...] = _layernorm(x, gamma_ref[...], beta_ref[...])


def joint_embedding(tok, pos, seg, gamma, beta):
    rows, D = tok.shape
    tm = _pick_rows_block(rows)
    row_spec = pl.BlockSpec((tm, D), lambda i: (i, 0))
    vec_spec = pl.BlockSpec((1, D), lambda i: (0, 0))
    return pl.pallas_call(
        embed_kernel,
        out_shape=jax.ShapeDtypeStruct((rows, D), jnp.float32),
        grid=(rows // tm,),
        in_specs=[row_spec, row_spec, row_spec, vec_spec, vec_spec],
        out_specs=row_spec,
        compiler_params=pltpu.CompilerParams(
            dimension_semantics=("parallel",),
            vmem_limit_bytes=VMEM_LIMIT_BYTES),
    )(tok, pos, seg, gamma, beta)


# ---------------------------------------------------------------------------
# Kernel 2: one nn.TransformerEncoderLayer (post-LN, ReLU FFN).
# Grid = (batch_blocks [parallel], ff_blocks [arbitrary]).
#   j == 0        : fused QKV proj + attention + out-proj + LN1 -> x1 scratch
#   every j       : FFN partial over the current (D, tFF)/(tFF, D) weight slab
#   j == last     : add bf2, residual + LN2, write output
# ---------------------------------------------------------------------------
def encoder_layer_kernel(ids_ref, x_ref,
                         wqkv_ref, bqkv_ref, wo_ref, bo_ref,
                         g1_ref, b1_ref,
                         w1_ref, bf1_ref, w2_ref, bf2_ref,
                         g2_ref, b2_ref,
                         out_ref,
                         x1_scr, acc_scr,
                         *, nhead):
    j = pl.program_id(1)
    nf = pl.num_programs(1)
    BB, S, D = x_ref.shape
    M = BB * S
    hd = D // nhead
    scale = 1.0 / math.sqrt(hd)

    @pl.when(j == 0)
    def _attention_and_ln1():
        x = x_ref[...].reshape(M, D)                         # (M, D) f32, batch folded into M
        xb = x.astype(jnp.bfloat16)

        # Fused QKV projection: one large MXU op, f32 accumulation.
        qkv = jnp.dot(xb, wqkv_ref[...],
                      preferred_element_type=jnp.float32) + bqkv_ref[...]   # (M, 3D)

        # src_key_padding_mask computed in-kernel from token ids.
        mask_add = jnp.where(ids_ref[...] == PAD_ID, NEG_INF, 0.0)          # (BB, S)
        mask_add = mask_add[:, None, :].astype(jnp.float32)                 # broadcast over queries

        attn = jnp.zeros((M, D), jnp.float32)
        for h in range(nhead):                               # static unroll over heads
            qh = (qkv[:, h * hd:(h + 1) * hd] * scale).astype(jnp.bfloat16).reshape(BB, S, hd)
            kh = qkv[:, D + h * hd:D + (h + 1) * hd].astype(jnp.bfloat16).reshape(BB, S, hd)
            vh = qkv[:, 2 * D + h * hd:2 * D + (h + 1) * hd].astype(jnp.bfloat16).reshape(BB, S, hd)

            s = jnp.einsum('bqd,bkd->bqk', qh, kh,
                           preferred_element_type=jnp.float32)              # (BB, S, S)
            s = s + mask_add
            s = s - jnp.max(s, axis=-1, keepdims=True)
            p = jnp.exp(s)
            p = p * pl.reciprocal(jnp.sum(p, axis=-1, keepdims=True), approx=True)

            ctx = jnp.einsum('bqk,bkd->bqd', p.astype(jnp.bfloat16), vh,
                             preferred_element_type=jnp.float32)            # (BB, S, hd)
            # Head concat fused into the output projection: attn += ctx_h @ Wo[h].
            attn = attn + jnp.dot(ctx.reshape(M, hd).astype(jnp.bfloat16),
                                  wo_ref[h * hd:(h + 1) * hd, :],
                                  preferred_element_type=jnp.float32)

        attn = attn + bo_ref[...]
        x1_scr[...] = _layernorm(x + attn, g1_ref[...], b1_ref[...])        # post-LN #1
        acc_scr[...] = jnp.zeros_like(acc_scr)

    # FFN partial over the current FF slab (reduction over grid axis 1).
    x1b = x1_scr[...].astype(jnp.bfloat16)
    h1 = jnp.dot(x1b, w1_ref[...], preferred_element_type=jnp.float32) + bf1_ref[...]
    h1 = jnp.maximum(h1, 0.0).astype(jnp.bfloat16)           # ReLU
    acc_scr[...] += jnp.dot(h1, w2_ref[...], preferred_element_type=jnp.float32)

    @pl.when(j == nf - 1)
    def _finalize():
        ff = acc_scr[...] + bf2_ref[...]
        out = _layernorm(x1_scr[...] + ff, g2_ref[...], b2_ref[...])        # post-LN #2
        out_ref[...] = out.reshape(BB, S, D)


def _const_spec(shape):
    nd = len(shape)
    return pl.BlockSpec(shape, lambda i, j, _nd=nd: (0,) * _nd)


def encoder_layer(x, input_ids, lp, nhead):
    B, S, D = x.shape
    FF = lp["w1"].shape[1]
    BB = _pick_batch_block(B, S)
    tFF = _pick_ff_block(FF)
    nb, nf = B // BB, FF // tFF
    M = BB * S

    kern = functools.partial(encoder_layer_kernel, nhead=nhead)
    return pl.pallas_call(
        kern,
        out_shape=jax.ShapeDtypeStruct((B, S, D), jnp.float32),
        grid=(nb, nf),
        in_specs=[
            pl.BlockSpec((BB, S), lambda i, j: (i, 0)),          # token ids
            pl.BlockSpec((BB, S, D), lambda i, j: (i, 0, 0)),    # activations
            _const_spec((D, 3 * D)),                             # wqkv (bf16)
            _const_spec((1, 3 * D)),                             # bqkv
            _const_spec((D, D)),                                 # wo (bf16)
            _const_spec((1, D)),                                 # bo
            _const_spec((1, D)), _const_spec((1, D)),            # g1, b1
            pl.BlockSpec((D, tFF), lambda i, j: (0, j)),         # w1 slab (bf16)
            pl.BlockSpec((1, tFF), lambda i, j: (0, j)),         # bf1 slab
            pl.BlockSpec((tFF, D), lambda i, j: (j, 0)),         # w2 slab (bf16)
            _const_spec((1, D)),                                 # bf2
            _const_spec((1, D)), _const_spec((1, D)),            # g2, b2
        ],
        out_specs=pl.BlockSpec((BB, S, D), lambda i, j: (i, 0, 0)),
        scratch_shapes=[pltpu.VMEM((M, D), jnp.float32),         # x1 (post-LN1)
                        pltpu.VMEM((M, D), jnp.float32)],        # FFN accumulator
        compiler_params=pltpu.CompilerParams(
            dimension_semantics=("parallel", "arbitrary"),
            vmem_limit_bytes=VMEM_LIMIT_BYTES),
    )(input_ids, x,
      lp["wqkv"], lp["bqkv"], lp["wo"], lp["bo"],
      lp["g1"], lp["b1"],
      lp["w1"], lp["bf1"], lp["w2"], lp["bf2"],
      lp["g2"], lp["b2"])


# ---------------------------------------------------------------------------
# Forward pass
# ---------------------------------------------------------------------------
def bert_forward(params, input_ids, segment_ids=None):
    B, S = input_ids.shape
    D = params["d_model"]
    if segment_ids is None:
        segment_ids = jnp.zeros_like(input_ids)
    positions = jnp.arange(S, dtype=jnp.int32)

    # Embedding table lookups (gather) kept as JAX glue; flatten to (B*S, D).
    tok = params["tok_emb"][input_ids].reshape(B * S, D)
    pos = jnp.broadcast_to(params["pos_emb"][positions][None], (B, S, D)).reshape(B * S, D)
    seg = params["seg_emb"][segment_ids].reshape(B * S, D)

    x = joint_embedding(tok, pos, seg, params["emb_gamma"], params["emb_beta"])
    x = x.reshape(B, S, D)

    for lp in params["layers"]:
        x = encoder_layer(x, input_ids, lp, params["nhead"])
    return x


# ---------------------------------------------------------------------------
# Deterministic parameter construction (synthetic weights)
# ---------------------------------------------------------------------------
def init_params(key, vocab_size, num_layers, d_model, nhead, dim_ff):
    keys = jax.random.split(key, 3 + num_layers)
    p = {
        "d_model": d_model,
        "nhead": nhead,
        "tok_emb": 0.02 * jax.random.normal(keys[0], (vocab_size, d_model), jnp.float32),
        "seg_emb": 0.02 * jax.random.normal(keys[1], (vocab_size, d_model), jnp.float32),
        # NOTE: positional table is (vocab_size, D) to match the spec module
        # (nn.Embedding(num_embeddings=vocab_size)); valid while S <= vocab_size.
        "pos_emb": 0.02 * jax.random.normal(keys[2], (vocab_size, d_model), jnp.float32),
        "emb_gamma": jnp.ones((1, d_model), jnp.float32),
        "emb_beta": jnp.zeros((1, d_model), jnp.float32),
        "layers": [],
    }
    for li in range(num_layers):
        lk = jax.random.split(keys[3 + li], 6)
        in_proj = 0.05 * jax.random.normal(lk[0], (3 * d_model, d_model), jnp.float32)
        wq, wk, wv = jnp.split(in_proj, 3, axis=0)          # each (D, D), PyTorch (out,in)
        wo = 0.05 * jax.random.normal(lk[1], (d_model, d_model), jnp.float32)
        w1 = 0.05 * jax.random.normal(lk[2], (dim_ff, d_model), jnp.float32)
        w2 = 0.05 * jax.random.normal(lk[3], (d_model, dim_ff), jnp.float32)
        bq = 0.01 * jax.random.normal(lk[4], (1, d_model), jnp.float32)
        bo = 0.01 * jax.random.normal(lk[5], (1, d_model), jnp.float32)
        zeros_d = jnp.zeros((1, d_model), jnp.float32)
        layer = {
            # Fused, pre-transposed QKV weight (D, 3D) in bf16; f32 biases.
            "wqkv": jnp.concatenate([wq.T, wk.T, wv.T], axis=1).astype(jnp.bfloat16),
            "bqkv": jnp.concatenate([bq, zeros_d, zeros_d], axis=1),
            "wo": wo.T.astype(jnp.bfloat16), "bo": bo,
            "g1": jnp.ones((1, d_model), jnp.float32), "b1": zeros_d,
            "w1": w1.T.astype(jnp.bfloat16), "bf1": jnp.zeros((1, dim_ff), jnp.float32),
            "w2": w2.T.astype(jnp.bfloat16), "bf2": zeros_d,
            "g2": jnp.ones((1, d_model), jnp.float32), "b2": zeros_d,
        }
        p["layers"].append(layer)
    return p


if __name__ == "__main__":
    VOCAB = 50
    NUM_LAYERS = 2
    D_MODEL = 32
    NHEAD = 4
    DIM_FF = 64
    B, S = 2, 8

    key = jax.random.PRNGKey(0)
    pkey, dkey = jax.random.split(key)
    params = init_params(pkey, VOCAB, NUM_LAYERS, D_MODEL, NHEAD, DIM_FF)

    # Token ids in [1, VOCAB); add a couple of PAD tokens to exercise the mask.
    input_ids = jax.random.randint(dkey, (B, S), 1, VOCAB, dtype=jnp.int32)
    input_ids = input_ids.at[0, S - 1].set(PAD_ID).at[1, S - 2:].set(PAD_ID)

    out = bert_forward(params, input_ids, None)
    out = jax.block_until_ready(out)
    assert out.shape == (B, S, D_MODEL)
    assert bool(jnp.all(jnp.isfinite(out)))
    print("KERNEL_OK")
</pallas_src>

<mosaic_0001>
module attributes {stable_mosaic.version = 11 : i64} {
  func.func @embed_kernel(%arg0: i32, %arg1: memref<16x32xf32, #tpu.memory_space<vmem>>, %arg2: memref<16x32xf32, #tpu.memory_space<vmem>>, %arg3: memref<16x32xf32, #tpu.memory_space<vmem>>, %arg4: memref<1x32xf32, #tpu.memory_space<vmem>>, %arg5: memref<1x32xf32, #tpu.memory_space<vmem>>, %arg6: memref<16x32xf32, #tpu.memory_space<vmem>>) attributes {dimension_semantics = [#tpu.dimension_semantics<parallel>], iteration_bounds = array<i64: 1>, scalar_prefetch = 0 : i64, scratch_operands = 0 : i64, tpu.core_type = #tpu.core_type<tc>, window_params = [{transform_indices = @transform_0, window_bounds = array<i64: 16, 32>}, {transform_indices = @transform_1, window_bounds = array<i64: 16, 32>}, {transform_indices = @transform_2, window_bounds = array<i64: 16, 32>}, {pipeline_mode = #tpu.pipeline_mode<synchronous>, transform_indices = @transform_3, window_bounds = array<i64: 1, 32>}, {pipeline_mode = #tpu.pipeline_mode<synchronous>, transform_indices = @transform_4, window_bounds = array<i64: 1, 32>}, {transform_indices = @transform_5, window_bounds = array<i64: 16, 32>}]} {
    %c0 = arith.constant 0 : index
    %c0_0 = arith.constant 0 : index
    %0 = vector.load %arg1[%c0, %c0_0] : memref<16x32xf32, #tpu.memory_space<vmem>>, vector<16x32xf32>
    %c0_1 = arith.constant 0 : index
    %c0_2 = arith.constant 0 : index
    %1 = vector.load %arg2[%c0_1, %c0_2] : memref<16x32xf32, #tpu.memory_space<vmem>>, vector<16x32xf32>
    %2 = arith.addf %0, %1 : vector<16x32xf32>
    %c0_3 = arith.constant 0 : index
    %c0_4 = arith.constant 0 : index
    %3 = vector.load %arg3[%c0_3, %c0_4] : memref<16x32xf32, #tpu.memory_space<vmem>>, vector<16x32xf32>
    %4 = arith.addf %2, %3 : vector<16x32xf32>
    %c0_5 = arith.constant 0 : index
    %c0_6 = arith.constant 0 : index
    %5 = vector.load %arg4[%c0_5, %c0_6] : memref<1x32xf32, #tpu.memory_space<vmem>>, vector<1x32xf32>
    %c0_7 = arith.constant 0 : index
    %c0_8 = arith.constant 0 : index
    %6 = vector.load %arg5[%c0_7, %c0_8] : memref<1x32xf32, #tpu.memory_space<vmem>>, vector<1x32xf32>
    %cst = arith.constant dense<0.000000e+00> : vector<16xf32>
    %7 = vector.multi_reduction <add>, %4, %cst [1] : vector<16x32xf32> to vector<16xf32>
    %8 = vector.shape_cast %7 : vector<16xf32> to vector<16x1xf32>
    %cst_9 = arith.constant 3.200000e+01 : f32
    %9 = vector.broadcast %cst_9 : f32 to vector<16x1xf32>
    %10 = arith.divf %8, %9 : vector<16x1xf32>
    %11 = vector.broadcast %10 : vector<16x1xf32> to vector<16x32xf32>
    %12 = arith.subf %4, %11 : vector<16x32xf32>
    %13 = arith.mulf %12, %12 : vector<16x32xf32>
    %cst_10 = arith.constant dense<0.000000e+00> : vector<16xf32>
    %14 = vector.multi_reduction <add>, %13, %cst_10 [1] : vector<16x32xf32> to vector<16xf32>
    %15 = vector.shape_cast %14 : vector<16xf32> to vector<16x1xf32>
    %cst_11 = arith.constant 3.200000e+01 : f32
    %16 = vector.broadcast %cst_11 : f32 to vector<16x1xf32>
    %17 = arith.divf %15, %16 : vector<16x1xf32>
    %18 = vector.broadcast %10 : vector<16x1xf32> to vector<16x32xf32>
    %19 = arith.subf %4, %18 : vector<16x32xf32>
    %cst_12 = arith.constant 9.99999974E-6 : f32
    %20 = vector.broadcast %cst_12 : f32 to vector<16x1xf32>
    %21 = arith.addf %17, %20 : vector<16x1xf32>
    %22 = math.rsqrt %21 : vector<16x1xf32>
    %23 = vector.broadcast %22 : vector<16x1xf32> to vector<16x32xf32>
    %24 = arith.mulf %19, %23 : vector<16x32xf32>
    %25 = vector.broadcast %5 : vector<1x32xf32> to vector<16x32xf32>
    %26 = arith.mulf %24, %25 : vector<16x32xf32>
    %27 = vector.broadcast %6 : vector<1x32xf32> to vector<16x32xf32>
    %28 = arith.addf %26, %27 : vector<16x32xf32>
    %c0_13 = arith.constant 0 : index
    %c0_14 = arith.constant 0 : index
    %29 = vector.load %arg6[%c0_13, %c0_14] : memref<16x32xf32, #tpu.memory_space<vmem>>, vector<16x32xf32>
    tpu.vector_store %arg6[%c0_13, %c0_14], %28 {strides = array<i32>} : memref<16x32xf32, #tpu.memory_space<vmem>>, vector<16x32xf32>,
    return
  }
  func.func @transform_0(%arg0: i32) -> (i32, i32) {
    %c0_i32 = arith.constant 0 : i32
    %c0_i32_0 = arith.constant 0 : i32
    return %arg0, %c0_i32 : i32, i32
  }
  func.func @transform_1(%arg0: i32) -> (i32, i32) {
    %c0_i32 = arith.constant 0 : i32
    %c0_i32_0 = arith.constant 0 : i32
    return %arg0, %c0_i32 : i32, i32
  }
  func.func @transform_2(%arg0: i32) -> (i32, i32) {
    %c0_i32 = arith.constant 0 : i32
    %c0_i32_0 = arith.constant 0 : i32
    return %arg0, %c0_i32 : i32, i32
  }
  func.func @transform_3(%arg0: i32) -> (i32, i32) {
    %c0_i32 = arith.constant 0 : i32
    %c0_i32_0 = arith.constant 0 : i32
    %c0_i32_1 = arith.constant 0 : i32
    return %c0_i32, %c0_i32_0 : i32, i32
  }
  func.func @transform_4(%arg0: i32) -> (i32, i32) {
    %c0_i32 = arith.constant 0 : i32
    %c0_i32_0 = arith.constant 0 : i32
    %c0_i32_1 = arith.constant 0 : i32
    return %c0_i32, %c0_i32_0 : i32, i32
  }
  func.func @transform_5(%arg0: i32) -> (i32, i32) {
    %c0_i32 = arith.constant 0 : i32
    %c0_i32_0 = arith.constant 0 : i32
    return %arg0, %c0_i32 : i32, i32
  }
}

</mosaic_0001>

<llo_original>
// kernel: tpu_custom_call.1
$region0: #{tpu_custom_call.1}
  #allocation0 [shape = 'u32[]', space=smem, size = 0x4, offset = 0x4, fixed_abs, tag = 'smem constant byte address 0x4 - core index']
  #allocation1 [shape = 'u32[144,128]{1,0:T(1,128)}', space=vmem, size = 0x12000, scoped, tag = 'internal scratch']
  %s0 = inlined_call_operand.hbm [shape: f32[16,32], index: 0, kind: input, shape index: {}]
  %s1 = inlined_call_operand.hbm [shape: f32[16,32], index: 1, kind: input, shape index: {}]
  %s2 = inlined_call_operand.hbm [shape: f32[16,32], index: 2, kind: input, shape index: {}]
  %s3 = inlined_call_operand.vmem [shape: f32[1,32], index: 3, kind: input, shape index: {}]
  %s4 = inlined_call_operand.vmem [shape: f32[1,32], index: 4, kind: input, shape index: {}]
  %s5 = inlined_call_operand.hbm [shape: f32[16,32], index: 5, kind: output, shape index: {}]
  %s6 = sld [smem:[#allocation0]]
  $region42: #{tpu_custom_call.1} parent=0
    _
  %s8 = ssub.s32 1, %s6
  %s9 = scalar_select 0, %s8, %s6
  $region1: #{tpu_custom_call.1} parent=0
    #allocation2 [shape = 'u8[8192]{0}', space=vmem, size = 0x2000, scoped, tag = 'input window, operand 0, single buffered']
    #allocation3 [shape = 's32[1]{0}', space=sflag, size = 0x4, scoped, tag = 'scoped memory for tpu_custom_call.1']
    #allocation4 [shape = 's32[1]{0}', space=sflag, size = 0x4, scoped, tag = 'scoped memory for tpu_custom_call.1']
    #allocation5 [shape = 'u8[8192]{0}', space=vmem, size = 0x2000, scoped, tag = 'input window, operand 1, single buffered']
    #allocation6 [shape = 's32[1]{0}', space=sflag, size = 0x4, scoped, tag = 'scoped memory for tpu_custom_call.1']
    #allocation7 [shape = 'u8[8192]{0}', space=vmem, size = 0x2000, scoped, tag = 'input window, operand 2, single buffered']
    #allocation8 [shape = 'u8[8192]{0}', space=vmem, size = 0x2000, scoped, tag = 'output window, operand 0, single buffered']
    %10 = vsyncpa [#allocation3], 0
    %11 = vsyncpa [#allocation6], 0
    %12 = vsyncpa [#allocation4], 0
    // Predicated region
    $region2: #{tpu_custom_call.1} parent=1 // pred_check
      _
    $region3: #{tpu_custom_call.1} parent=1 // pred_check_branch
      %14 = sbr.rel (0) target = $region5
    $region4: #{tpu_custom_call.1} parent=1 // pred_region
      %s16 = ssub.s32 256, 256
      %17 = vsyncadd [#allocation3], %s16
      %s18 = sshll.u32 [#allocation2], 4
      %s19 = int_to_ptr.vmem [resolvable:$true] %s18
      %24 = dma.hbm_to_vmem [thread:$0]  %s0, 256, %s19, [#allocation3], 128, 128, 8
    $region5: #{tpu_custom_call.1} parent=1 // pred_fallthru
      _
    // Predicated region
    $region6: #{tpu_custom_call.1} parent=1 // pred_check
      _
    $region7: #{tpu_custom_call.1} parent=1 // pred_check_branch
      %26 = sbr.rel (0) target = $region9
    $region8: #{tpu_custom_call.1} parent=1 // pred_region
      %s28 = ssub.s32 256, 256
      %29 = vsyncadd [#allocation6], %s28
      %s30 = sshll.u32 [#allocation5], 4
      %s31 = int_to_ptr.vmem [resolvable:$true] %s30
      %36 = dma.hbm_to_vmem [thread:$0]  %s1, 256, %s31, [#allocation6], 128, 128, 8
    $region9: #{tpu_custom_call.1} parent=1 // pred_fallthru
      _
    // Predicated region
    $region10: #{tpu_custom_call.1} parent=1 // pred_check
      _
    $region11: #{tpu_custom_call.1} parent=1 // pred_check_branch
      %38 = sbr.rel (0) target = $region13
    $region12: #{tpu_custom_call.1} parent=1 // pred_region
      %s40 = ssub.s32 256, 256
      %41 = vsyncadd [#allocation6], %s40
      %s42 = sshll.u32 [#allocation7], 4
      %s43 = int_to_ptr.vmem [resolvable:$true] %s42
      %48 = dma.hbm_to_vmem [thread:$0]  %s2, 256, %s43, [#allocation6], 128, 128, 8
    $region13: #{tpu_custom_call.1} parent=1 // pred_fallthru
      _
    // Predicated region
    $region14: #{tpu_custom_call.1} parent=1 // pred_check
      _
    $region15: #{tpu_custom_call.1} parent=1 // pred_check_branch
      %50 = sbr.rel (0) target = $region17
    $region16: #{tpu_custom_call.1} parent=1 // pred_region
      _
    $region17: #{tpu_custom_call.1} parent=1 // pred_fallthru
      _
    // Predicated region
    $region18: #{tpu_custom_call.1} parent=1 // pred_check
      _
    $region19: #{tpu_custom_call.1} parent=1 // pred_check_branch
      %52 = sbr.rel (0) target = $region21
    $region20: #{tpu_custom_call.1} parent=1 // pred_region
      _
    $region21: #{tpu_custom_call.1} parent=1 // pred_fallthru
      _
    // Predicated region
    $region22: #{tpu_custom_call.1} parent=1 // pred_check
      _
    $region23: #{tpu_custom_call.1} parent=1 // pred_check_branch
      %54 = sbr.rel (0) target = $region25
    $region24: #{tpu_custom_call.1} parent=1 // pred_region
      %55 = dma.done [#allocation3], 256
    $region25: #{tpu_custom_call.1} parent=1 // pred_fallthru
      _
    // Predicated region
    $region26: #{tpu_custom_call.1} parent=1 // pred_check
      _
    $region27: #{tpu_custom_call.1} parent=1 // pred_check_branch
      %57 = sbr.rel (0) target = $region29
    $region28: #{tpu_custom_call.1} parent=1 // pred_region
      %58 = dma.done [#allocation6], 256
    $region29: #{tpu_custom_call.1} parent=1 // pred_fallthru
      _
    // Predicated region
    $region30: #{tpu_custom_call.1} parent=1 // pred_check
      _
    $region31: #{tpu_custom_call.1} parent=1 // pred_check_branch
      %60 = sbr.rel (0) target = $region33
    $region32: #{tpu_custom_call.1} parent=1 // pred_region
      %61 = dma.done [#allocation6], 256
    $region33: #{tpu_custom_call.1} parent=1 // pred_fallthru
      _
    %v62 = vld [vmem:[#allocation2] sm:$0xff]
    %v63 = vld [vmem:[#allocation2 + $0x8] sm:$0xff]
    %v64 = vld [vmem:[#allocation5] sm:$0xff]
    %v65 = vld [vmem:[#allocation5 + $0x8] sm:$0xff]
    %v66 = vadd.f32 %v62, %v64
    %v67 = vadd.f32 %v63, %v65
    %v68 = vld [vmem:[#allocation7] sm:$0xff]
    %v69 = vld [vmem:[#allocation7 + $0x8] sm:$0xff]
    %v70 = vadd.f32 %v66, %v68
    %v71 = vadd.f32 %v67, %v69
    %v72 = vld [vmem:[%s3] sm:$0x1]
    %v73 = vld [vmem:[%s4] sm:$0x1]
    %vm74 = vcmask 261120
    %v75 = vsel %vm74, %v70, 0.0
    %76 = vadd.xlane.f32.xlu0 %v75
    %v77 = vpop.xlane.xlu0 %76
    %v78 = vsel %vm74, %v71, 0.0
    %79 = vadd.xlane.f32.xlu0 %v78
    %v80 = vpop.xlane.xlu0 %79
    %v81 = vrcp.pop 32.0
    %v82 = vmul.f32 %v77, %v81
    %v83 = vmul.f32 %v80, %v81
    %v84 = vsub.f32 %v70, %v82
    %v85 = vsub.f32 %v71, %v83
    %v86 = vmul.f32 %v84, %v84
    %v87 = vmul.f32 %v85, %v85
    %v88 = vsel %vm74, %v86, 0.0
    %89 = vadd.xlane.f32.xlu0 %v88
    %v90 = vpop.xlane.xlu0 %89
    %v91 = vsel %vm74, %v87, 0.0
    %92 = vadd.xlane.f32.xlu0 %v91
    %v93 = vpop.xlane.xlu0 %92
    %v94 = vmul.f32 %v90, %v81
    %v95 = vmul.f32 %v93, %v81
    %v96 = vadd.f32 %v94, 1e-05
    %v97 = vadd.f32 %v95, 1e-05
    %v98 = vrsqrt.pop %v96
    %v99 = vrsqrt.pop %v97
    %v100 = vmul.f32 %v84, %v98
    %v101 = vmul.f32 %v85, %v99
    %v103 = vlaneseq
    %v104 = vshrl.u32 %v103, 7
    %v105 = vsub.s32 0, %v104
    %v106 = vrot.slane %v72, %v105
    %v108 = vmul.f32 %v100, %v106
    %v109 = vmul.f32 %v101, %v106
    %v111 = vlaneseq
    %v112 = vshrl.u32 %v111, 7
    %v113 = vsub.s32 0, %v112
    %v114 = vrot.slane %v73, %v113
    %v116 = vadd.f32 %v108, %v114
    %v117 = vadd.f32 %v109, %v114
    %118 = vst.msk [vmem:[#allocation8] sm:$0xff] %vm74, %v116
    %119 = vst.msk [vmem:[#allocation8 + $0x8] sm:$0xff] %vm74, %v117
    // Predicated region
    $region34: #{tpu_custom_call.1} parent=1 // pred_check
      _
    $region35: #{tpu_custom_call.1} parent=1 // pred_check_branch
      %121 = sbr.rel (0) target = $region37
    $region36: #{tpu_custom_call.1} parent=1 // pred_region
      %s123 = ssub.s32 256, 256
      %124 = vsyncadd [#allocation4], %s123
      %s125 = sshll.u32 [#allocation8], 4
      %s126 = int_to_ptr.vmem [resolvable:$true] %s125
      %131 = dma.vmem_to_hbm [thread:$0]  %s126, 256, %s5, [#allocation4], 128, 128, 8
    $region37: #{tpu_custom_call.1} parent=1 // pred_fallthru
      _
    // Predicated region
    $region38: #{tpu_custom_call.1} parent=1 // pred_check
      _
    $region39: #{tpu_custom_call.1} parent=1 // pred_check_branch
      %133 = sbr.rel (0) target = $region41
    $region40: #{tpu_custom_call.1} parent=1 // pred_region
      %134 = dma.done [#allocation4], 256
    $region41: #{tpu_custom_call.1} parent=1 // pred_fallthru
      _
    %135 = vsyncpa [#allocation3], 1
    %136 = vsyncpa [#allocation6], 1
    %137 = vsyncpa [#allocation4], 1

</llo_original>
